<compile_context>
chip_gen: v6e
topology: v6e:2x2x1
jax: 0.10.0
libtpu: 0.0.40
codegen_flags: <defaults>
</compile_context>

<pallas_src>
import numpy as np
import jax
import jax.numpy as jnp
from jax import lax
from jax.experimental import pallas as pl
from jax.experimental.pallas import tpu as pltpu


# --------------------------------------------------------------------------
# Generation-aware VMEM budget
# --------------------------------------------------------------------------
def _vmem_limit_bytes():
    """~96 MiB on v5e/v6e (128 MiB physical), ~48 MiB on v7x (64 MiB)."""
    try:
        cap = int(pltpu.get_tpu_info().vmem_capacity_bytes)
    except Exception:
        cap = 64 * 1024 * 1024          # v7x-safe default
    return int(max(32 * 1024 * 1024, min(int(cap * 0.75), 96 * 1024 * 1024)))


_VMEM_LIMIT = _vmem_limit_bytes()
_COMPILER_PARAMS = pltpu.CompilerParams(
    dimension_semantics=("parallel", "parallel"),
    vmem_limit_bytes=_VMEM_LIMIT,
)


# --------------------------------------------------------------------------
# Band (row-tile) sizing
# --------------------------------------------------------------------------
def _per_row_vmem_bytes(W, K, C, Cout, use_res, out_bytes):
    """VMEM bytes consumed per band row: streamed blocks (double buffered)
    plus in-kernel temporaries (band copy, per-dy folded slab, f32 acc)."""
    Wp = W + K - 1
    stream = Wp * C * 2 * 2                       # halo-band input, x2 buffers
    stream += W * Cout * out_bytes * 2            # output, x2 buffers
    if use_res:
        stream += W * Cout * 2 * 2                # residual, x2 buffers
    temp = Wp * C * 2                             # concatenated band
    temp += W * K * C * 2                         # per-dy folded slab (bf16)
    temp += W * Cout * 4 * 2                      # f32 accumulator + epilogue
    return stream + temp


def _pick_band_rows(H, K, W, C, Cout, use_res, out_bytes):
    """Pick TH (output rows per band).  TH must divide H and be a multiple of
    K-1 so the halo block of the next band starts on a block boundary.
    Returns (TH, KH): KH = K-1 for the two-block halo scheme, or None when no
    valid TH exists (single full-height band)."""
    KH = K - 1
    budget = _VMEM_LIMIT // 3
    per_row = _per_row_vmem_bytes(W, K, C, Cout, use_res, out_bytes)
    cands = [t for t in range(KH, H + 1, KH) if H % t == 0]
    if not cands:
        return H, None                            # single-band fallback
    cap = max(KH, budget // max(per_row, 1))
    fit = [t for t in cands if t <= cap] or [cands[0]]
    TH = max(fit)
    # Prefer >=2 bands per image (keeps both v7x TensorCores busy at batch 1)
    # as long as each band still feeds the MXU a reasonable M dimension.
    if H // TH < 2:
        smaller = [t for t in fit if H // t >= 2 and t * W >= 128]
        if smaller:
            TH = max(smaller)
    return TH, KH


# --------------------------------------------------------------------------
# Pallas kernel
# --------------------------------------------------------------------------
def _make_conv_band_kernel(K, TH, W, C, Cout, two_block, act, use_res):
    """Banded conv: halo'd row band -> in-VMEM tap folding -> K MXU matmuls
    (contraction K*C) -> fused shift / PReLU / tanh / residual epilogue.

    Ref order: band_a, [band_b], weights(K,K*C,Cout), shift(1,Cout),
               [alpha(1,Cout)], [res(1,TH,W,Cout)], out(1,TH,W,Cout).
    """
    KC = K * C

    def kernel(*refs):
        it = iter(refs)
        a_ref = next(it)
        b_ref = next(it) if two_block else None
        w_ref = next(it)
        shift_ref = next(it)
        alpha_ref = next(it) if act == "prelu" else None
        res_ref = next(it) if use_res else None
        out_ref = next(it)

        if two_block:
            # (TH + K - 1, Wp, C): this band's rows + next band's halo rows.
            band = jnp.concatenate([a_ref[0], b_ref[0]], axis=0)
        else:
            band = a_ref[0]                       # full padded height

        acc = jnp.zeros((TH * W, Cout), jnp.float32)
        for dy in range(K):                       # K matmuls, contraction K*C
            rows = band[dy:dy + TH]               # (TH, Wp, C)
            slab = jnp.concatenate(
                [rows[:, dx:dx + W, :] for dx in range(K)], axis=-1)
            slab = slab.reshape(TH * W, KC)       # folded taps (bf16)
            acc = acc + jnp.dot(slab, w_ref[dy],
                                preferred_element_type=jnp.float32)

        y = acc + shift_ref[...]                  # bias / folded-BN shift
        if act == "prelu":
            y = jnp.where(y >= 0.0, y, alpha_ref[...] * y)
        elif act == "tanh":
            y = jnp.tanh(y)
        if use_res:
            y = y + res_ref[0].reshape(TH * W, Cout).astype(jnp.float32)
        out_ref[0] = y.reshape(TH, W, Cout).astype(out_ref.dtype)

    return kernel


# --------------------------------------------------------------------------
# Layer wrapper
# --------------------------------------------------------------------------
def conv_layer(x, p, *, K, pad, act="none", res=None, out_dtype=jnp.bfloat16):
    """Fused Conv2d (+bias/BN shift + activation + residual) on NHWC input.
    The K*K taps are gathered in-kernel from a halo'd row band (no HBM
    im2col)."""
    N, H, W, C = x.shape
    assert 2 * pad == K - 1, "expects 'same'-style symmetric padding"
    w = p["w"]                                    # (K*K, Cin, Cout)
    Cout = w.shape[-1]
    Wp = W + K - 1

    # Fold the BN / bias *scale* into the weights; keep only the shift.
    w_f = (w * p["scale"][None, None, :]).reshape(K, K * C, Cout)
    w_f = w_f.astype(jnp.bfloat16)
    shift = p["shift"].reshape(1, Cout).astype(jnp.float32)

    use_res = res is not None
    out_bytes = jnp.dtype(out_dtype).itemsize
    TH, KH = _pick_band_rows(H, K, W, C, Cout, use_res, out_bytes)
    two_block = KH is not None
    nbands = (H // TH) if two_block else 1

    # Pad once; the per-band DMA then reads each row ~once (plus a small halo
    # re-read) instead of the K*K-amplified im2col tensor.
    xp = jnp.pad(x.astype(jnp.bfloat16),
                 ((0, 0), (pad, pad), (pad, pad), (0, 0)))   # (N, H+K-1, Wp, C)

    if two_block:
        step = TH // KH
        inputs = [xp, xp]
        in_specs = [
            pl.BlockSpec((1, TH, Wp, C), lambda n, i: (n, i, 0, 0)),
            pl.BlockSpec((1, KH, Wp, C),
                         lambda n, i: (n, (i + 1) * step, 0, 0)),
        ]
    else:
        inputs = [xp]
        in_specs = [pl.BlockSpec((1, H + K - 1, Wp, C),
                                 lambda n, i: (n, 0, 0, 0))]

    inputs += [w_f, shift]
    in_specs += [
        pl.BlockSpec((K, K * C, Cout), lambda n, i: (0, 0, 0)),  # VMEM-resident
        pl.BlockSpec((1, Cout), lambda n, i: (0, 0)),
    ]
    if act == "prelu":
        inputs.append(p["alpha"].reshape(1, Cout).astype(jnp.float32))
        in_specs.append(pl.BlockSpec((1, Cout), lambda n, i: (0, 0)))
    if use_res:
        inputs.append(res.astype(jnp.bfloat16))
        in_specs.append(pl.BlockSpec((1, TH, W, Cout),
                                     lambda n, i: (n, i, 0, 0)))

    flops = 2 * N * H * W * (K * K * C) * Cout
    bytes_accessed = (xp.size * 2 + int(w_f.size) * 2
                      + N * H * W * Cout * out_bytes
                      + (N * H * W * Cout * 2 if use_res else 0))
    cost = pl.CostEstimate(
        flops=int(flops),
        transcendentals=int(N * H * W * Cout) if act == "tanh" else 0,
        bytes_accessed=int(bytes_accessed),
    )

    out = pl.pallas_call(
        _make_conv_band_kernel(K, TH, W, C, Cout, two_block, act, use_res),
        out_shape=jax.ShapeDtypeStruct((N, H, W, Cout), out_dtype),
        grid=(N, nbands),
        in_specs=in_specs,
        out_specs=pl.BlockSpec((1, TH, W, Cout), lambda n, i: (n, i, 0, 0)),
        compiler_params=_COMPILER_PARAMS,
        cost_estimate=cost,
    )(*inputs)
    return out


def pixel_shuffle_nhwc(x, r):
    """PyTorch PixelShuffle semantics, NHWC layout (XLA glue)."""
    N, H, W, Crr = x.shape
    C = Crr // (r * r)
    x = x.reshape(N, H, W, C, r, r)
    x = jnp.transpose(x, (0, 1, 4, 2, 5, 3))      # N, H, i, W, j, C
    return x.reshape(N, H * r, W * r, C)


# --------------------------------------------------------------------------
# Parameter initialization (synthetic, deterministic)
# --------------------------------------------------------------------------
def _init_conv(key, Cin, Cout, K, use_bn, prelu_channels=None, alpha_expand=1):
    kw, kb, kg, kbe, km, kv = jax.random.split(key, 6)
    fan_in = Cin * K * K
    w = jax.random.normal(kw, (K * K, Cin, Cout), jnp.float32) / np.sqrt(fan_in)
    if use_bn:
        eps = 1e-5
        gamma = 1.0 + 0.1 * jax.random.normal(kg, (Cout,), jnp.float32)
        beta = 0.1 * jax.random.normal(kbe, (Cout,), jnp.float32)
        mean = 0.1 * jax.random.normal(km, (Cout,), jnp.float32)
        var = 1.0 + 0.1 * jnp.abs(jax.random.normal(kv, (Cout,), jnp.float32))
        scale = gamma / jnp.sqrt(var + eps)
        shift = beta - mean * scale
    else:
        bias = 0.01 * jax.random.normal(kb, (Cout,), jnp.float32)
        scale = jnp.ones((Cout,), jnp.float32)
        shift = bias
    if prelu_channels is not None:
        alpha = jnp.full((prelu_channels,), 0.25, jnp.float32)   # PyTorch default
        alpha = jnp.repeat(alpha, alpha_expand)                  # fuse across shuffle
    else:
        alpha = jnp.zeros((Cout,), jnp.float32)
    return {"w": w, "scale": scale, "shift": shift, "alpha": alpha}


def init_generator_params(key, in_channels=3, num_residual_blocks=16,
                          scale_factor=2):
    keys = jax.random.split(key, 2 * num_residual_blocks + 5)
    it = iter(keys)
    params = {
        "initial": _init_conv(next(it), in_channels, 64, 9,
                              use_bn=False, prelu_channels=64),
        "res_blocks": [
            {
                "conv1": _init_conv(next(it), 64, 64, 3,
                                    use_bn=True, prelu_channels=64),
                "conv2": _init_conv(next(it), 64, 64, 3,
                                    use_bn=True, prelu_channels=None),
            }
            for _ in range(num_residual_blocks)
        ],
        "bottleneck": _init_conv(next(it), 64, 64, 3,
                                 use_bn=True, prelu_channels=None),
        "upsample": [
            _init_conv(next(it), 64, 64 * scale_factor ** 2, 3, use_bn=False,
                       prelu_channels=64, alpha_expand=scale_factor ** 2)
            for _ in range(2)
        ],
        "final": _init_conv(next(it), 64, in_channels, 9,
                            use_bn=False, prelu_channels=None),
    }
    return params


# --------------------------------------------------------------------------
# Generator forward (matches the PyTorch Generator.forward)
# --------------------------------------------------------------------------
def generator_forward(params, x_nchw, *, scale_factor=2):
    x = jnp.transpose(x_nchw, (0, 2, 3, 1)).astype(jnp.bfloat16)   # NCHW -> NHWC

    initial = conv_layer(x, params["initial"], K=9, pad=4, act="prelu")

    h = initial
    for rb in params["res_blocks"]:
        # TODO(synk): fuse conv1+PReLU+conv2+residual into one banded kernel.
        y = conv_layer(h, rb["conv1"], K=3, pad=1, act="prelu")
        h = conv_layer(y, rb["conv2"], K=3, pad=1, act="none", res=h)

    h = conv_layer(h, params["bottleneck"], K=3, pad=1, act="none", res=initial)

    for ub in params["upsample"]:
        # PReLU fused pre-shuffle (alpha expanded across the r*r factor).
        y = conv_layer(h, ub, K=3, pad=1, act="prelu")
        # TODO(synk): fold the PixelShuffle permutation into the next conv.
        h = pixel_shuffle_nhwc(y, scale_factor)

    out = conv_layer(h, params["final"], K=9, pad=4, act="tanh",
                     out_dtype=jnp.float32)
    return jnp.transpose(out, (0, 3, 1, 2))        # NHWC -> NCHW


# --------------------------------------------------------------------------
# Reference conv (for the in-script numeric sanity check)
# --------------------------------------------------------------------------
def _reference_conv(x, p, K, pad, act):
    w = (p["w"] * p["scale"][None, None, :]).reshape(K, K, x.shape[-1], -1)
    y = lax.conv_general_dilated(
        x.astype(jnp.float32), w.astype(jnp.float32), (1, 1),
        [(pad, pad), (pad, pad)],
        dimension_numbers=("NHWC", "HWIO", "NHWC"))
    y = y + p["shift"]
    if act == "prelu":
        y = jnp.where(y >= 0.0, y, p["alpha"] * y)
    elif act == "tanh":
        y = jnp.tanh(y)
    return y


if __name__ == "__main__":
    key = jax.random.PRNGKey(0)
    kx, kp = jax.random.split(key)

    # Numeric sanity check of the banded conv kernel against XLA conv
    # (generous tolerance: bf16 activations/weights vs f32 reference).
    for (K, pad, Cin, Cout) in ((3, 1, 8, 16), (9, 4, 4, 8)):
        kk = jax.random.fold_in(key, K)
        k1, k2, k3 = jax.random.split(kk, 3)
        xt = jax.random.normal(k1, (1, 16, 16, Cin), jnp.float32)
        pt = {
            "w": jax.random.normal(k2, (K * K, Cin, Cout), jnp.float32)
            / np.sqrt(K * K * Cin),
            "scale": jnp.ones((Cout,), jnp.float32),
            "shift": 0.1 * jax.random.normal(k3, (Cout,), jnp.float32),
            "alpha": jnp.full((Cout,), 0.25, jnp.float32),
        }
        got = conv_layer(xt, pt, K=K, pad=pad, act="prelu").astype(jnp.float32)
        want = _reference_conv(xt, pt, K, pad, "prelu")
        err = float(jnp.max(jnp.abs(got - want)))
        assert err < 0.1, f"conv check failed (K={K}): max abs err {err}"

    # Full generator forward.
    N, C, H, W = 2, 3, 16, 16
    x = jax.random.normal(kx, (N, C, H, W), jnp.float32)
    params = init_generator_params(kp, in_channels=3,
                                   num_residual_blocks=16, scale_factor=2)

    fwd = jax.jit(generator_forward)
    out = jax.block_until_ready(fwd(params, x))

    assert out.shape == (N, 3, H * 4, W * 4), out.shape
    assert out.dtype == jnp.float32
    assert bool(jnp.all(jnp.isfinite(out)))
    assert bool(jnp.all(jnp.abs(out) <= 1.0))      # tanh output range
    print("KERNEL_OK")
</pallas_src>

<mosaic_0001>
module attributes {stable_mosaic.version = 11 : i64} {
  func.func @kernel(%arg0: i32, %arg1: i32, %arg2: memref<1x8x18x8xbf16, #tpu.memory_space<vmem>>, %arg3: memref<1x2x18x8xbf16, #tpu.memory_space<vmem>>, %arg4: memref<3x24x16xbf16, #tpu.memory_space<vmem>>, %arg5: memref<1x16xf32, #tpu.memory_space<vmem>>, %arg6: memref<1x16xf32, #tpu.memory_space<vmem>>, %arg7: memref<1x8x16x16xbf16, #tpu.memory_space<vmem>>) attributes {dimension_semantics = [#tpu.dimension_semantics<parallel>, #tpu.dimension_semantics<parallel>], iteration_bounds = array<i64: 1, 2>, scalar_prefetch = 0 : i64, scratch_operands = 0 : i64, tpu.core_type = #tpu.core_type<tc>, window_params = [{transform_indices = @transform_0, window_bounds = array<i64: 1, 8, 18, 8>}, {transform_indices = @transform_1, window_bounds = array<i64: 1, 2, 18, 8>}, {pipeline_mode = #tpu.pipeline_mode<synchronous>, transform_indices = @transform_2, window_bounds = array<i64: 3, 24, 16>}, {pipeline_mode = #tpu.pipeline_mode<synchronous>, transform_indices = @transform_3, window_bounds = array<i64: 1, 16>}, {pipeline_mode = #tpu.pipeline_mode<synchronous>, transform_indices = @transform_4, window_bounds = array<i64: 1, 16>}, {transform_indices = @transform_5, window_bounds = array<i64: 1, 8, 16, 16>}]} {
    %c0 = arith.constant 0 : index
    %c0_0 = arith.constant 0 : index
    %c0_1 = arith.constant 0 : index
    %c0_2 = arith.constant 0 : index
    %0 = vector.load %arg2[%c0, %c0_0, %c0_1, %c0_2] : memref<1x8x18x8xbf16, #tpu.memory_space<vmem>>, vector<1x8x18x8xbf16>
    %1 = vector.shape_cast %0 : vector<1x8x18x8xbf16> to vector<8x18x8xbf16>
    %c0_3 = arith.constant 0 : index
    %c0_4 = arith.constant 0 : index
    %c0_5 = arith.constant 0 : index
    %c0_6 = arith.constant 0 : index
    %2 = vector.load %arg3[%c0_3, %c0_4, %c0_5, %c0_6] : memref<1x2x18x8xbf16, #tpu.memory_space<vmem>>, vector<1x2x18x8xbf16>
    %3 = vector.shape_cast %2 : vector<1x2x18x8xbf16> to vector<2x18x8xbf16>
    %4 = tpu.concatenate %1, %3 in 0 : vector<8x18x8xbf16>, vector<2x18x8xbf16> -> vector<10x18x8xbf16>
    %cst = arith.constant 0.000000e+00 : f32
    %5 = vector.broadcast %cst : f32 to vector<128x16xf32>
    %6 = vector.extract_strided_slice %4 {offsets = [0, 0, 0], sizes = [8, 18, 8], strides = [1, 1, 1]} : vector<10x18x8xbf16> to vector<8x18x8xbf16>
    %7 = vector.extract_strided_slice %6 {offsets = [0, 0, 0], sizes = [8, 16, 8], strides = [1, 1, 1]} : vector<8x18x8xbf16> to vector<8x16x8xbf16>
    %8 = vector.extract_strided_slice %6 {offsets = [0, 1, 0], sizes = [8, 16, 8], strides = [1, 1, 1]} : vector<8x18x8xbf16> to vector<8x16x8xbf16>
    %9 = vector.extract_strided_slice %6 {offsets = [0, 2, 0], sizes = [8, 16, 8], strides = [1, 1, 1]} : vector<8x18x8xbf16> to vector<8x16x8xbf16>
    %10 = tpu.concatenate %7, %8, %9 in 2 : vector<8x16x8xbf16>, vector<8x16x8xbf16>, vector<8x16x8xbf16> -> vector<8x16x24xbf16>
    %11 = vector.shape_cast %10 : vector<8x16x24xbf16> to vector<128x24xbf16>
    %c0_7 = arith.constant 0 : index
    %c0_8 = arith.constant 0 : index
    %c0_9 = arith.constant 0 : index
    %12 = vector.load %arg4[%c0_7, %c0_8, %c0_9] : memref<3x24x16xbf16, #tpu.memory_space<vmem>>, vector<1x24x16xbf16>
    %13 = vector.shape_cast %12 : vector<1x24x16xbf16> to vector<24x16xbf16>
    %cst_10 = arith.constant dense<0.000000e+00> : vector<128x16xf32>
    %14 = tpu.matmul %11, %13, %cst_10 {dimension_numbers = #tpu.dot_dimension_numbers<[1], [0], [0], [1], [0, 0, 1, 1], [], []>} : vector<128x24xbf16>, vector<24x16xbf16>, vector<128x16xf32> -> vector<128x16xf32>
    %15 = arith.addf %5, %14 : vector<128x16xf32>
    %16 = vector.extract_strided_slice %4 {offsets = [1, 0, 0], sizes = [8, 18, 8], strides = [1, 1, 1]} : vector<10x18x8xbf16> to vector<8x18x8xbf16>
    %17 = vector.extract_strided_slice %16 {offsets = [0, 0, 0], sizes = [8, 16, 8], strides = [1, 1, 1]} : vector<8x18x8xbf16> to vector<8x16x8xbf16>
    %18 = vector.extract_strided_slice %16 {offsets = [0, 1, 0], sizes = [8, 16, 8], strides = [1, 1, 1]} : vector<8x18x8xbf16> to vector<8x16x8xbf16>
    %19 = vector.extract_strided_slice %16 {offsets = [0, 2, 0], sizes = [8, 16, 8], strides = [1, 1, 1]} : vector<8x18x8xbf16> to vector<8x16x8xbf16>
    %20 = tpu.concatenate %17, %18, %19 in 2 : vector<8x16x8xbf16>, vector<8x16x8xbf16>, vector<8x16x8xbf16> -> vector<8x16x24xbf16>
    %21 = vector.shape_cast %20 : vector<8x16x24xbf16> to vector<128x24xbf16>
    %c1 = arith.constant 1 : index
    %c0_11 = arith.constant 0 : index
    %c0_12 = arith.constant 0 : index
    %22 = vector.load %arg4[%c1, %c0_11, %c0_12] : memref<3x24x16xbf16, #tpu.memory_space<vmem>>, vector<1x24x16xbf16>
    %23 = vector.shape_cast %22 : vector<1x24x16xbf16> to vector<24x16xbf16>
    %cst_13 = arith.constant dense<0.000000e+00> : vector<128x16xf32>
    %24 = tpu.matmul %21, %23, %cst_13 {dimension_numbers = #tpu.dot_dimension_numbers<[1], [0], [0], [1], [0, 0, 1, 1], [], []>} : vector<128x24xbf16>, vector<24x16xbf16>, vector<128x16xf32> -> vector<128x16xf32>
    %25 = arith.addf %15, %24 : vector<128x16xf32>
    %26 = vector.extract_strided_slice %4 {offsets = [2, 0, 0], sizes = [8, 18, 8], strides = [1, 1, 1]} : vector<10x18x8xbf16> to vector<8x18x8xbf16>
    %27 = vector.extract_strided_slice %26 {offsets = [0, 0, 0], sizes = [8, 16, 8], strides = [1, 1, 1]} : vector<8x18x8xbf16> to vector<8x16x8xbf16>
    %28 = vector.extract_strided_slice %26 {offsets = [0, 1, 0], sizes = [8, 16, 8], strides = [1, 1, 1]} : vector<8x18x8xbf16> to vector<8x16x8xbf16>
    %29 = vector.extract_strided_slice %26 {offsets = [0, 2, 0], sizes = [8, 16, 8], strides = [1, 1, 1]} : vector<8x18x8xbf16> to vector<8x16x8xbf16>
    %30 = tpu.concatenate %27, %28, %29 in 2 : vector<8x16x8xbf16>, vector<8x16x8xbf16>, vector<8x16x8xbf16> -> vector<8x16x24xbf16>
    %31 = vector.shape_cast %30 : vector<8x16x24xbf16> to vector<128x24xbf16>
    %c2 = arith.constant 2 : index
    %c0_14 = arith.constant 0 : index
    %c0_15 = arith.constant 0 : index
    %32 = vector.load %arg4[%c2, %c0_14, %c0_15] : memref<3x24x16xbf16, #tpu.memory_space<vmem>>, vector<1x24x16xbf16>
    %33 = vector.shape_cast %32 : vector<1x24x16xbf16> to vector<24x16xbf16>
    %cst_16 = arith.constant dense<0.000000e+00> : vector<128x16xf32>
    %34 = tpu.matmul %31, %33, %cst_16 {dimension_numbers = #tpu.dot_dimension_numbers<[1], [0], [0], [1], [0, 0, 1, 1], [], []>} : vector<128x24xbf16>, vector<24x16xbf16>, vector<128x16xf32> -> vector<128x16xf32>
    %35 = arith.addf %25, %34 : vector<128x16xf32>
    %c0_17 = arith.constant 0 : index
    %c0_18 = arith.constant 0 : index
    %36 = vector.load %arg5[%c0_17, %c0_18] : memref<1x16xf32, #tpu.memory_space<vmem>>, vector<1x16xf32>
    %37 = vector.broadcast %36 : vector<1x16xf32> to vector<128x16xf32>
    %38 = arith.addf %35, %37 : vector<128x16xf32>
    %cst_19 = arith.constant 0.000000e+00 : f32
    %39 = vector.broadcast %cst_19 : f32 to vector<128x16xf32>
    %40 = arith.cmpf oge, %38, %39 : vector<128x16xf32>
    %c0_20 = arith.constant 0 : index
    %c0_21 = arith.constant 0 : index
    %41 = vector.load %arg6[%c0_20, %c0_21] : memref<1x16xf32, #tpu.memory_space<vmem>>, vector<1x16xf32>
    %42 = vector.broadcast %41 : vector<1x16xf32> to vector<128x16xf32>
    %43 = arith.mulf %42, %38 : vector<128x16xf32>
    %44 = arith.select %40, %38, %43 : vector<128x16xi1>, vector<128x16xf32>
    %45 = vector.shape_cast %44 : vector<128x16xf32> to vector<8x16x16xf32>
    %46 = arith.truncf %45 : vector<8x16x16xf32> to vector<8x16x16xbf16>
    %c0_22 = arith.constant 0 : index
    %c0_23 = arith.constant 0 : index
    %c0_24 = arith.constant 0 : index
    %c0_25 = arith.constant 0 : index
    %47 = vector.load %arg7[%c0_22, %c0_23, %c0_24, %c0_25] : memref<1x8x16x16xbf16, #tpu.memory_space<vmem>>, vector<1x8x16x16xbf16>
    %48 = vector.shape_cast %47 : vector<1x8x16x16xbf16> to vector<8x16x16xbf16>
    %49 = vector.shape_cast %46 : vector<8x16x16xbf16> to vector<1x8x16x16xbf16>
    tpu.vector_store %arg7[%c0_22, %c0_23, %c0_24, %c0_25], %49 {strides = array<i32>} : memref<1x8x16x16xbf16, #tpu.memory_space<vmem>>, vector<1x8x16x16xbf16>,
    return
  }
  func.func @transform_0(%arg0: i32, %arg1: i32) -> (i32, i32, i32, i32) {
    %c0_i32 = arith.constant 0 : i32
    %c0_i32_0 = arith.constant 0 : i32
    %c0_i32_1 = arith.constant 0 : i32
    return %arg0, %arg1, %c0_i32, %c0_i32_0 : i32, i32, i32, i32
  }
  func.func @transform_1(%arg0: i32, %arg1: i32) -> (i32, i32, i32, i32) {
    %c1_i32 = arith.constant 1 : i32
    %0 = arith.addi %arg1, %c1_i32 : i32
    %c4_i32 = arith.constant 4 : i32
    %1 = arith.muli %0, %c4_i32 : i32
    %c0_i32 = arith.constant 0 : i32
    %c0_i32_0 = arith.constant 0 : i32
    %c0_i32_1 = arith.constant 0 : i32
    return %arg0, %1, %c0_i32, %c0_i32_0 : i32, i32, i32, i32
  }
  func.func @transform_2(%arg0: i32, %arg1: i32) -> (i32, i32, i32) {
    %c0_i32 = arith.constant 0 : i32
    %c0_i32_0 = arith.constant 0 : i32
    %c0_i32_1 = arith.constant 0 : i32
    %c0_i32_2 = arith.constant 0 : i32
    return %c0_i32, %c0_i32_0, %c0_i32_1 : i32, i32, i32
  }
  func.func @transform_3(%arg0: i32, %arg1: i32) -> (i32, i32) {
    %c0_i32 = arith.constant 0 : i32
    %c0_i32_0 = arith.constant 0 : i32
    %c0_i32_1 = arith.constant 0 : i32
    return %c0_i32, %c0_i32_0 : i32, i32
  }
  func.func @transform_4(%arg0: i32, %arg1: i32) -> (i32, i32) {
    %c0_i32 = arith.constant 0 : i32
    %c0_i32_0 = arith.constant 0 : i32
    %c0_i32_1 = arith.constant 0 : i32
    return %c0_i32, %c0_i32_0 : i32, i32
  }
  func.func @transform_5(%arg0: i32, %arg1: i32) -> (i32, i32, i32, i32) {
    %c0_i32 = arith.constant 0 : i32
    %c0_i32_0 = arith.constant 0 : i32
    %c0_i32_1 = arith.constant 0 : i32
    return %arg0, %arg1, %c0_i32, %c0_i32_0 : i32, i32, i32, i32
  }
}

</mosaic_0001>

<llo_original>
// kernel: tpu_custom_call.1
$region0: #{tpu_custom_call.1}
  #allocation0 [shape = 'u32[]', space=smem, size = 0x4, offset = 0x4, fixed_abs, tag = 'smem constant byte address 0x4 - core index']
  #allocation1 [shape = 'u32[144,128]{1,0:T(1,128)}', space=vmem, size = 0x12000, scoped, tag = 'internal scratch']
  %s0 = inlined_call_operand.vmem [shape: bf16[1,18,18,8], index: 0, kind: input, shape index: {}]
  %s1 = inlined_call_operand.vmem [shape: bf16[1,18,18,8], index: 1, kind: input, shape index: {}]
  %s2 = inlined_call_operand.vmem [shape: bf16[3,24,16], index: 2, kind: input, shape index: {}]
  %s3 = inlined_call_operand.vmem [shape: f32[1,16], index: 3, kind: input, shape index: {}]
  %s4 = inlined_call_operand.vmem [shape: f32[1,16], index: 4, kind: input, shape index: {}]
  %s5 = inlined_call_operand.hbm [shape: bf16[1,16,16,16], index: 5, kind: output, shape index: {}]
  %s6 = sld [smem:[#allocation0]]
  $region53: #{tpu_custom_call.1} parent=0
    _
  %s8 = ssub.s32 1, %s6
  %s9 = scalar_select 0, %s8, %s6
  $region1: #{tpu_custom_call.1} parent=0
    #allocation2 [shape = 'u8[65536]{0}', space=vmem, size = 0x10000, scoped, tag = 'output window, operand 0']
    #allocation3 [shape = 's32[2]{0}', space=sflag, size = 0x8, scoped, tag = 'scoped memory for tpu_custom_call.1']
    %10 = vsyncpa [#allocation3], 0
    %s11 = scalar_lea.sflag [#allocation3], 1
    %12 = vsyncpa %s11, 0
    loop: start=0, step=1, limit=4
    $region2: #{tpu_custom_call.1} parent=1 // loop_pre_header
      _
    $region3: #{tpu_custom_call.1} parent=1 // loop_header
      %s14 = sphi 0, %s18
      %p15 = scmp.ge.s32.totalorder %s14, 4
      %s21 = sphi 0, %s33
      %s22 = sphi 0, %s29
      %s23 = sphi 0, %s21
      %s24 = sphi 0, %s22
      %s25 = sphi 0, %s23
      %s26 = sphi 0, %s24
      %s38 = sphi 0, %s40
      %s41 = sphi 0, %s38
      %s42 = sphi 0, %s41
      %s58 = sphi 0, %s42
      %s70 = sphi 0, %s72
      %s73 = sphi 0, %s70
      %s74 = sphi 0, %s73
      %s90 = sphi 0, %s74
      %s94 = sphi 0, %s94
      %s96 = sphi 0, %s94
      %s97 = sphi 0, %s96
      %s111 = sphi 0, %s97
      %s115 = sphi 0, %s115
      %s117 = sphi 0, %s115
      %s118 = sphi 0, %s117
      %s132 = sphi 0, %s118
      %s136 = sphi 0, %s136
      %s138 = sphi 0, %s136
      %s139 = sphi 0, %s138
      %s153 = sphi 0, %s139
      %s161 = sphi 0, %s163
      %s164 = sphi 0, %s161
      %s165 = sphi 0, %s164
      %s181 = sphi 0, %s165
    $region4: #{tpu_custom_call.1} parent=1 // loop_header_branch
      %17 = sbr.rel (%p15) target = $region8
    $region5: #{tpu_custom_call.1} parent=1 // loop_body
      %s19 = ssub.s32 %s14, 1
      %s20 = ssub.s32 %s14, 2
      %s27 = sadd.s32 1, %s22
      %p28 = scmp.ge.s32.totalorder %s27, 2
      %s29 = scalar_select %p28, 0, %s27
      %s30 = sadd.s32 1, %s21
      %s31 = scalar_select %p28, %s30, %s21
      %p32 = scmp.ge.s32.totalorder %s31, 1
      %s33 = scalar_select %p32, 0, %s31
      %s34 = ssub.s32 %s21, %s33
      %s35 = ssub.s32 %s22, %s29
      %s36 = sor.u32 %s34, %s35
      %p37 = scmp.eq.s32.totalorder %s36, 0
      %s39 = sadd.s32 %s38, 1
      %s40 = scalar_select %p37, %s38, %s39
      %p43 = pneg %p37
      %p44 = scmp.eq.s32.totalorder %s14, 1
      %p45 = por %p43, %p44
      %p46 = scmp.ne.s32.totalorder %s38, %s41
      %p47 = scmp.eq.s32.totalorder %s14, 0
      %p48 = por %p46, %p47
      %p49 = scmp.ne.s32.totalorder %s38, %s41
      %p50 = scmp.eq.s32.totalorder %s19, 1
      %p51 = por %p49, %p50
      %p52 = scmp.ne.s32.totalorder %s41, %s42
      %p53 = scmp.eq.s32.totalorder %s19, 0
      %p54 = por %p52, %p53
      %p55 = scmp.ne.s32.totalorder %s41, %s42
      %p56 = scmp.eq.s32.totalorder %s20, 1
      %p57 = por %p55, %p56
      %p59 = scmp.ne.s32.totalorder %s42, %s58
      %p60 = scmp.eq.s32.totalorder %s20, 0
      %p61 = por %p59, %p60
      %s62 = sadd.s32 %s22, 1
      %s63 = smul.u32 %s62, 4
      %s64 = sadd.s32 %s29, 1
      %s65 = smul.u32 %s64, 4
      %s66 = ssub.s32 %s21, %s33
      %s67 = ssub.s32 %s63, %s65
      %s68 = sor.u32 %s66, %s67
      %p69 = scmp.eq.s32.totalorder %s68, 0
      %s71 = sadd.s32 %s70, 1
      %s72 = scalar_select %p69, %s70, %s71
      %p75 = pneg %p69
      %p76 = scmp.eq.s32.totalorder %s14, 1
      %p77 = por %p75, %p76
      %p78 = scmp.ne.s32.totalorder %s70, %s73
      %p79 = scmp.eq.s32.totalorder %s14, 0
      %p80 = por %p78, %p79
      %p81 = scmp.ne.s32.totalorder %s70, %s73
      %p82 = scmp.eq.s32.totalorder %s19, 1
      %p83 = por %p81, %p82
      %p84 = scmp.ne.s32.totalorder %s73, %s74
      %p85 = scmp.eq.s32.totalorder %s19, 0
      %p86 = por %p84, %p85
      %p87 = scmp.ne.s32.totalorder %s73, %s74
      %p88 = scmp.eq.s32.totalorder %s20, 1
      %p89 = por %p87, %p88
      %p91 = scmp.ne.s32.totalorder %s74, %s90
      %p92 = scmp.eq.s32.totalorder %s20, 0
      %p93 = por %p91, %p92
      %s95 = sadd.s32 %s94, 1
      %p98 = scmp.eq.s32.totalorder %s14, 1
      %p99 = scmp.ne.s32.totalorder %s94, %s96
      %p100 = scmp.eq.s32.totalorder %s14, 0
      %p101 = por %p99, %p100
      %p102 = scmp.ne.s32.totalorder %s94, %s96
      %p103 = scmp.eq.s32.totalorder %s19, 1
      %p104 = por %p102, %p103
      %p105 = scmp.ne.s32.totalorder %s96, %s97
      %p106 = scmp.eq.s32.totalorder %s19, 0
      %p107 = por %p105, %p106
      %p108 = scmp.ne.s32.totalorder %s96, %s97
      %p109 = scmp.eq.s32.totalorder %s20, 1
      %p110 = por %p108, %p109
      %p112 = scmp.ne.s32.totalorder %s97, %s111
      %p113 = scmp.eq.s32.totalorder %s20, 0
      %p114 = por %p112, %p113
      %s116 = sadd.s32 %s115, 1
      %p119 = scmp.eq.s32.totalorder %s14, 1
      %p120 = scmp.ne.s32.totalorder %s115, %s117
      %p121 = scmp.eq.s32.totalorder %s14, 0
      %p122 = por %p120, %p121
      %p123 = scmp.ne.s32.totalorder %s115, %s117
      %p124 = scmp.eq.s32.totalorder %s19, 1
      %p125 = por %p123, %p124
      %p126 = scmp.ne.s32.totalorder %s117, %s118
      %p127 = scmp.eq.s32.totalorder %s19, 0
      %p128 = por %p126, %p127
      %p129 = scmp.ne.s32.totalorder %s117, %s118
      %p130 = scmp.eq.s32.totalorder %s20, 1
      %p131 = por %p129, %p130
      %p133 = scmp.ne.s32.totalorder %s118, %s132
      %p134 = scmp.eq.s32.totalorder %s20, 0
      %p135 = por %p133, %p134
      %s137 = sadd.s32 %s136, 1
      %p140 = scmp.eq.s32.totalorder %s14, 1
      %p141 = scmp.ne.s32.totalorder %s136, %s138
      %p142 = scmp.eq.s32.totalorder %s14, 0
      %p143 = por %p141, %p142
      %p144 = scmp.ne.s32.totalorder %s136, %s138
      %p145 = scmp.eq.s32.totalorder %s19, 1
      %p146 = por %p144, %p145
      %p147 = scmp.ne.s32.totalorder %s138, %s139
      %p148 = scmp.eq.s32.totalorder %s19, 0
      %p149 = por %p147, %p148
      %p150 = scmp.ne.s32.totalorder %s138, %s139
      %p151 = scmp.eq.s32.totalorder %s20, 1
      %p152 = por %p150, %p151
      %p154 = scmp.ne.s32.totalorder %s139, %s153
      %p155 = scmp.eq.s32.totalorder %s20, 0
      %p156 = por %p154, %p155
      %s157 = ssub.s32 %s21, %s33
      %s158 = ssub.s32 %s22, %s29
      %s159 = sor.u32 %s157, %s158
      %p160 = scmp.eq.s32.totalorder %s159, 0
      %s162 = sadd.s32 %s161, 1
      %s163 = scalar_select %p160, %s161, %s162
      %p166 = pneg %p160
      %p167 = scmp.eq.s32.totalorder %s14, 1
      %p168 = por %p166, %p167
      %p169 = scmp.ne.s32.totalorder %s161, %s164
      %p170 = scmp.eq.s32.totalorder %s14, 0
      %p171 = por %p169, %p170
      %p172 = scmp.ne.s32.totalorder %s161, %s164
      %p173 = scmp.eq.s32.totalorder %s19, 1
      %p174 = por %p172, %p173
      %p175 = scmp.ne.s32.totalorder %s164, %s165
      %p176 = scmp.eq.s32.totalorder %s19, 0
      %p177 = por %p175, %p176
      %p178 = scmp.ne.s32.totalorder %s164, %s165
      %p179 = scmp.eq.s32.totalorder %s20, 1
      %p180 = por %p178, %p179
      %p182 = scmp.ne.s32.totalorder %s165, %s181
      %p183 = scmp.eq.s32.totalorder %s20, 0
      %p184 = por %p182, %p183
      %p185 = scmp.le.s32.totalorder 1, %s14
      %p186 = scmp.lt.s32.totalorder %s14, 3
      %p187 = pnand %p185, %p186
      %p188 = pneg %p187
      // Predicated region
      $region9: #{tpu_custom_call.1} parent=5 // pred_check
        _
      $region10: #{tpu_custom_call.1} parent=5 // pred_check_branch
        %190 = sbr.rel (%p187) target = $region12
      $region11: #{tpu_custom_call.1} parent=5 // pred_region
        %s191 = ssub.s32 %s14, 1
        // Predicated region
        $region13: #{tpu_custom_call.1} parent=11 // pred_check
          %p192 = pneg %p107
        $region14: #{tpu_custom_call.1} parent=11 // pred_check_branch
          %194 = sbr.rel (%p192) target = $region16
        $region15: #{tpu_custom_call.1} parent=11 // pred_region
          _
        $region16: #{tpu_custom_call.1} parent=11 // pred_fallthru
          _
        // Predicated region
        $region17: #{tpu_custom_call.1} parent=11 // pred_check
          %p195 = pneg %p128
        $region18: #{tpu_custom_call.1} parent=11 // pred_check_branch
          %197 = sbr.rel (%p195) target = $region20
        $region19: #{tpu_custom_call.1} parent=11 // pred_region
          _
        $region20: #{tpu_custom_call.1} parent=11 // pred_fallthru
          _
        // Predicated region
        $region21: #{tpu_custom_call.1} parent=11 // pred_check
          %p198 = pneg %p149
        $region22: #{tpu_custom_call.1} parent=11 // pred_check_branch
          %200 = sbr.rel (%p198) target = $region24
        $region23: #{tpu_custom_call.1} parent=11 // pred_region
          _
        $region24: #{tpu_custom_call.1} parent=11 // pred_fallthru
          _
      $region12: #{tpu_custom_call.1} parent=5 // pred_fallthru
        _
      %p201 = scmp.lt.s32.totalorder %s14, 2
      // Predicated region
      $region25: #{tpu_custom_call.1} parent=5 // pred_check
        %p202 = pneg %p201
      $region26: #{tpu_custom_call.1} parent=5 // pred_check_branch
        %204 = sbr.rel (%p202) target = $region28
      $region27: #{tpu_custom_call.1} parent=5 // pred_region
        // Predicated region
        $region29: #{tpu_custom_call.1} parent=27 // pred_check
          %p205 = pneg %p48
        $region30: #{tpu_custom_call.1} parent=27 // pred_check_branch
          %207 = sbr.rel (%p205) target = $region32
        $region31: #{tpu_custom_call.1} parent=27 // pred_region
          %s208 = smul.u32 8, %s22
          %s209 = ssub.s32 18, %s208
          %p210 = scmp.lt.s32.totalorder %s209, 8
          %s211 = scalar_select %p210, %s209, 8
          %s212 = smul.u32 64, %s211
          %s213 = smul.u32 %s212, 3
          %p214 = scmp.lt.s32.totalorder %s21, 0
          %s215 = scalar_select %p214, %s21, 0
          %p216 = scmp.lt.s32.totalorder %s208, 17
          %s217 = scalar_select %p216, %s208, 17
          %s218 = smul.addr %s217, 3
          %s219 = smul.addr %s215, 54
          %s220 = sadd.s32 %s218, %s219
          %s221 = smul.addr %s220, 4
          %s222 = scalar_lea.vmem %s0, %s221
          %s223 = smul.u32 8, %s22
          %s224 = ssub.s32 18, %s223
          %p225 = scmp.lt.s32.totalorder %s224, 8
          %s226 = scalar_select %p225, %s224, 8
          %s227 = smul.u32 64, %s226
          %s228 = smul.u32 %s227, 3
        $region32: #{tpu_custom_call.1} parent=27 // pred_fallthru
          _
        // Predicated region
        $region33: #{tpu_custom_call.1} parent=27 // pred_check
          %p229 = pneg %p80
        $region34: #{tpu_custom_call.1} parent=27 // pred_check_branch
          %231 = sbr.rel (%p229) target = $region36
        $region35: #{tpu_custom_call.1} parent=27 // pred_region
          %s232 = sadd.s32 %s22, 1
          %s233 = smul.u32 %s232, 4
          %s234 = smul.u32 2, %s233
          %p235 = scmp.lt.s32.totalorder %s21, 0
          %s236 = scalar_select %p235, %s21, 0
          %p237 = scmp.lt.s32.totalorder %s234, 17
          %s238 = scalar_select %p237, %s234, 17
          %s239 = smul.addr %s238, 3
          %s240 = smul.addr %s236, 54
          %s241 = sadd.s32 %s239, %s240
          %s242 = smul.addr %s241, 4
          %s243 = scalar_lea.vmem %s1, %s242
          %s244 = sadd.s32 %s22, 1
          %s245 = smul.u32 %s244, 4
          %s246 = smul.u32 2, %s245
        $region36: #{tpu_custom_call.1} parent=27 // pred_fallthru
          _
      $region28: #{tpu_custom_call.1} parent=5 // pred_fallthru
        _
      %p247 = scmp.le.s32.totalorder 1, %s14
      %p248 = scmp.lt.s32.totalorder %s14, 3
      %p249 = pnand %p247, %p248
      %p250 = pneg %p249
      // Predicated region
      $region37: #{tpu_custom_call.1} parent=5 // pred_check
        _
      $region38: #{tpu_custom_call.1} parent=5 // pred_check_branch
        %252 = sbr.rel (%p249) target = $region40
      $region39: #{tpu_custom_call.1} parent=5 // pred_region
        %s253 = ssub.s32 %s14, 1
        %s254 = smul.u32 8, %s24
        %s255 = ssub.s32 18, %s254
        %p256 = scmp.lt.s32.totalorder %s255, 8
        %s257 = scalar_select %p256, %s255, 8
        %s258 = smul.u32 64, %s257
        %s259 = smul.u32 %s258, 3
        %p260 = scmp.lt.s32.totalorder %s23, 0
        %s261 = scalar_select %p260, %s23, 0
        %p262 = scmp.lt.s32.totalorder %s254, 17
        %s263 = scalar_select %p262, %s254, 17
        %s264 = smul.addr %s263, 3
        %s265 = smul.addr %s261, 54
        %s266 = sadd.s32 %s264, %s265
        %s267 = smul.addr %s266, 4
        %s268 = scalar_lea.vmem %s0, %s267
        %p269 = pneg %p54
        %p270 = pneg %p51
        %s271 = sadd.s32 %s24, 1
        %s272 = smul.u32 %s271, 4
        %s273 = smul.u32 2, %s272
        %p274 = scmp.lt.s32.totalorder %s23, 0
        %s275 = scalar_select %p274, %s23, 0
        %p276 = scmp.lt.s32.totalorder %s273, 17
        %s277 = scalar_select %p276, %s273, 17
        %s278 = smul.addr %s277, 3
        %s279 = smul.addr %s275, 54
        %s280 = sadd.s32 %s278, %s279
        %s281 = smul.addr %s280, 4
        %s282 = scalar_lea.vmem %s1, %s281
        %p283 = pneg %p86
        %p284 = pneg %p83
        %p285 = pneg %p107
        %p286 = pneg %p104
        %p287 = pneg %p128
        %p288 = pneg %p125
        %p289 = pneg %p149
        %p290 = pneg %p146
        %p291 = pneg %p177
        %p292 = pneg %p174
        %s293 = sand.u32 %s164, 1
        %s294 = scalar_lea.sflag [#allocation3], %s293
        %s295 = sand.u32 %s164, 1
        %s296 = smul.addr %s295, 64
        %s297 = scalar_lea.vmem [#allocation2], %s296
        %s298 = smul.u32 8, %s24
        %s299 = ssub.s32 18, %s298
        %p300 = scmp.lt.s32.totalorder %s299, 8
        %s301 = scalar_select %p300, %s299, 8
        %s302 = smul.u32 64, %s301
        %s303 = smul.u32 %s302, 3
        %p304 = scmp.lt.s32.totalorder %s23, 0
        %s305 = scalar_select %p304, %s23, 0
        %p306 = scmp.lt.s32.totalorder %s298, 17
        %s307 = scalar_select %p306, %s298, 17
        %s308 = smul.addr %s307, 3
        %s309 = smul.addr %s305, 54
        %s310 = sadd.s32 %s308, %s309
        %s311 = smul.addr %s310, 4
        %s312 = scalar_lea.vmem %s0, %s311
        %s313 = smul.u32 8, %s24
        %s314 = ssub.s32 18, %s313
        %p315 = scmp.lt.s32.totalorder %s314, 8
        %s316 = scalar_select %p315, %s314, 8
        %s317 = smul.u32 64, %s316
        %s318 = smul.u32 %s317, 3
        %s319 = sadd.s32 %s24, 1
        %s320 = smul.u32 %s319, 4
        %s321 = smul.u32 2, %s320
        %p322 = scmp.lt.s32.totalorder %s23, 0
        %s323 = scalar_select %p322, %s23, 0
        %p324 = scmp.lt.s32.totalorder %s321, 17
        %s325 = scalar_select %p324, %s321, 17
        %s326 = smul.addr %s325, 3
        %s327 = smul.addr %s323, 54
        %s328 = sadd.s32 %s326, %s327
        %s329 = smul.addr %s328, 4
        %s330 = scalar_lea.vmem %s1, %s329
        %s331 = sadd.s32 %s24, 1
        %s332 = smul.u32 %s331, 4
        %s333 = smul.u32 2, %s332
        %s334 = smul.u32 8, %s24
        %v336 = vld [vmem:[%s312] sm:$0xf]
        %v337 = vld [vmem:[%s312 + $0x4] sm:$0xf]
        %v338 = vld [vmem:[%s312 + $0x8] sm:$0x1]
        %v339 = vld [vmem:[%s312 + $0xc] sm:$0xf]
        %v340 = vld [vmem:[%s312 + $0x10] sm:$0xf]
        %v341 = vld [vmem:[%s312 + $0x14] sm:$0x1]
        %v342 = vld [vmem:[%s312 + $0x18] sm:$0xf]
        %v343 = vld [vmem:[%s312 + $0x1c] sm:$0xf]
        %v344 = vld [vmem:[%s312 + $0x20] sm:$0x1]
        %v345 = vld [vmem:[%s312 + $0x24] sm:$0xf]
        %v346 = vld [vmem:[%s312 + $0x28] sm:$0xf]
        %v347 = vld [vmem:[%s312 + $0x2c] sm:$0x1]
        %v348 = vld [vmem:[%s312 + $0x30] sm:$0xf]
        %v349 = vld [vmem:[%s312 + $0x34] sm:$0xf]
        %v350 = vld [vmem:[%s312 + $0x38] sm:$0x1]
        %v351 = vld [vmem:[%s312 + $0x3c] sm:$0xf]
        %v352 = vld [vmem:[%s312 + $0x40] sm:$0xf]
        %v353 = vld [vmem:[%s312 + $0x44] sm:$0x1]
        %v354 = vld [vmem:[%s312 + $0x48] sm:$0xf]
        %v355 = vld [vmem:[%s312 + $0x4c] sm:$0xf]
        %v356 = vld [vmem:[%s312 + $0x50] sm:$0x1]
        %v357 = vld [vmem:[%s312 + $0x54] sm:$0xf]
        %v358 = vld [vmem:[%s312 + $0x58] sm:$0xf]
        %v359 = vld [vmem:[%s312 + $0x5c] sm:$0x1]
        %v360 = vld [vmem:[%s330] sm:$0xf]
        %v361 = vld [vmem:[%s330 + $0x4] sm:$0xf]
        %v362 = vld [vmem:[%s330 + $0x8] sm:$0x1]
        %v363 = vld [vmem:[%s330 + $0xc] sm:$0xf]
        %v364 = vld [vmem:[%s330 + $0x10] sm:$0xf]
        %v365 = vld [vmem:[%s330 + $0x14] sm:$0x1]
        %v382 = vunpack.c.l.b16 %v336
        %v383 = vunpack.c.l.b16 %v337
        %v384 = vunpack.c.l.b16 %v339
        %v385 = vunpack.c.l.b16 %v340
        %v386 = vunpack.c.l.b16 %v342
        %v387 = vunpack.c.l.b16 %v343
        %v388 = vunpack.c.l.b16 %v345
        %v389 = vunpack.c.l.b16 %v346
        %v390 = vunpack.c.l.b16 %v348
        %v391 = vunpack.c.l.b16 %v349
        %v392 = vunpack.c.l.b16 %v351
        %v393 = vunpack.c.l.b16 %v352
        %v394 = vunpack.c.l.b16 %v354
        %v395 = vunpack.c.l.b16 %v355
        %v396 = vunpack.c.l.b16 %v357
        %v397 = vunpack.c.l.b16 %v358
        %v398 = vpack.c.b16 %v383, %v382
        %v399 = vpack.c.b16 %v385, %v384
        %v400 = vpack.c.b16 %v387, %v386
        %v401 = vpack.c.b16 %v389, %v388
        %v402 = vpack.c.b16 %v391, %v390
        %v403 = vpack.c.b16 %v393, %v392
        %v404 = vpack.c.b16 %v395, %v394
        %v405 = vpack.c.b16 %v397, %v396
        %v414 = vunpack.c.l.b16 %v338
        %v415 = vunpack.c.l.b16 %v341
        %v416 = vunpack.c.l.b16 %v344
        %v417 = vunpack.c.l.b16 %v347
        %v418 = vunpack.c.l.b16 %v350
        %v419 = vunpack.c.l.b16 %v353
        %v420 = vunpack.c.l.b16 %v356
        %v421 = vunpack.c.l.b16 %v359
        %v422 = vpack.c.b16 %v414, %v414
        %v423 = vpack.c.b16 %v415, %v415
        %v424 = vpack.c.b16 %v416, %v416
        %v425 = vpack.c.b16 %v417, %v417
        %v426 = vpack.c.b16 %v418, %v418
        %v427 = vpack.c.b16 %v419, %v419
        %v428 = vpack.c.b16 %v420, %v420
        %v429 = vpack.c.b16 %v421, %v421
        %vm430 = vsmask.f32 7424
        %v432 = vshrl.u32 %v398, 16
        %v434 = vshll.u32 %v398, 16
        %v436 = vrot.slane %v434, 1
        %v437 = vor.u32 %v432, %v436
        %v439 = vshll.u32 %v422, 16
        %v441 = vrot.slane %v439, 1
        %v442 = vsel %vm430, %v437, %v441
        %v444 = vshrl.u32 %v399, 16
        %v446 = vshll.u32 %v399, 16
        %v448 = vrot.slane %v446, 1
        %v449 = vor.u32 %v444, %v448
        %v451 = vshll.u32 %v423, 16
        %v453 = vrot.slane %v451, 1
        %v454 = vsel %vm430, %v449, %v453
        %v456 = vshrl.u32 %v400, 16
        %v458 = vshll.u32 %v400, 16
        %v460 = vrot.slane %v458, 1
        %v461 = vor.u32 %v456, %v460
        %v463 = vshll.u32 %v424, 16
        %v465 = vrot.slane %v463, 1
        %v466 = vsel %vm430, %v461, %v465
        %v468 = vshrl.u32 %v401, 16
        %v470 = vshll.u32 %v401, 16
        %v472 = vrot.slane %v470, 1
        %v473 = vor.u32 %v468, %v472
        %v475 = vshll.u32 %v425, 16
        %v477 = vrot.slane %v475, 1
        %v478 = vsel %vm430, %v473, %v477
        %v480 = vshrl.u32 %v402, 16
        %v482 = vshll.u32 %v402, 16
        %v484 = vrot.slane %v482, 1
        %v485 = vor.u32 %v480, %v484
        %v487 = vshll.u32 %v426, 16
        %v489 = vrot.slane %v487, 1
        %v490 = vsel %vm430, %v485, %v489
        %v492 = vshrl.u32 %v403, 16
        %v494 = vshll.u32 %v403, 16
        %v496 = vrot.slane %v494, 1
        %v497 = vor.u32 %v492, %v496
        %v499 = vshll.u32 %v427, 16
        %v501 = vrot.slane %v499, 1
        %v502 = vsel %vm430, %v497, %v501
        %v504 = vshrl.u32 %v404, 16
        %v506 = vshll.u32 %v404, 16
        %v508 = vrot.slane %v506, 1
        %v509 = vor.u32 %v504, %v508
        %v511 = vshll.u32 %v428, 16
        %v513 = vrot.slane %v511, 1
        %v514 = vsel %vm430, %v509, %v513
        %v516 = vshrl.u32 %v405, 16
        %v518 = vshll.u32 %v405, 16
        %v520 = vrot.slane %v518, 1
        %v521 = vor.u32 %v516, %v520
        %v523 = vshll.u32 %v429, 16
        %v525 = vrot.slane %v523, 1
        %v526 = vsel %vm430, %v521, %v525
        %527 = vrot.lane.b32.xlu0 %v442, 8
        %v528 = vpop.permute.xlu0 %527
        %529 = vrot.lane.b32.xlu0 %v454, 8
        %v530 = vpop.permute.xlu0 %529
        %531 = vrot.lane.b32.xlu0 %v466, 8
        %v532 = vpop.permute.xlu0 %531
        %533 = vrot.lane.b32.xlu0 %v478, 8
        %v534 = vpop.permute.xlu0 %533
        %535 = vrot.lane.b32.xlu0 %v490, 8
        %v536 = vpop.permute.xlu0 %535
        %537 = vrot.lane.b32.xlu0 %v502, 8
        %v538 = vpop.permute.xlu0 %537
        %539 = vrot.lane.b32.xlu0 %v514, 8
        %v540 = vpop.permute.xlu0 %539
        %541 = vrot.lane.b32.xlu0 %v526, 8
        %v542 = vpop.permute.xlu0 %541
        %vm543 = vcmask 1046528
        %v544 = vrot.slane %v398, 1
        %v545 = vrot.slane %v422, 1
        %v546 = vsel %vm543, %v544, %v545
        %v547 = vrot.slane %v399, 1
        %v548 = vrot.slane %v423, 1
        %v549 = vsel %vm543, %v547, %v548
        %v550 = vrot.slane %v400, 1
        %v551 = vrot.slane %v424, 1
        %v552 = vsel %vm543, %v550, %v551
        %v553 = vrot.slane %v401, 1
        %v554 = vrot.slane %v425, 1
        %v555 = vsel %vm543, %v553, %v554
        %v556 = vrot.slane %v402, 1
        %v557 = vrot.slane %v426, 1
        %v558 = vsel %vm543, %v556, %v557
        %v559 = vrot.slane %v403, 1
        %v560 = vrot.slane %v427, 1
        %v561 = vsel %vm543, %v559, %v560
        %v562 = vrot.slane %v404, 1
        %v563 = vrot.slane %v428, 1
        %v564 = vsel %vm543, %v562, %v563
        %v565 = vrot.slane %v405, 1
        %v566 = vrot.slane %v429, 1
        %v567 = vsel %vm543, %v565, %v566
        %568 = vrot.lane.b32.xlu0 %v546, 16
        %v569 = vpop.permute.xlu0 %568
        %570 = vrot.lane.b32.xlu0 %v549, 16
        %v571 = vpop.permute.xlu0 %570
        %572 = vrot.lane.b32.xlu0 %v552, 16
        %v573 = vpop.permute.xlu0 %572
        %574 = vrot.lane.b32.xlu0 %v555, 16
        %v575 = vpop.permute.xlu0 %574
        %576 = vrot.lane.b32.xlu0 %v558, 16
        %v577 = vpop.permute.xlu0 %576
        %578 = vrot.lane.b32.xlu0 %v561, 16
        %v579 = vpop.permute.xlu0 %578
        %580 = vrot.lane.b32.xlu0 %v564, 16
        %v581 = vpop.permute.xlu0 %580
        %582 = vrot.lane.b32.xlu0 %v567, 16
        %v583 = vpop.permute.xlu0 %582
        %vm584 = vcmask 64512
        %v586 = vsel %vm584, %v398, %v528
        %v588 = vsel %vm584, %v399, %v530
        %v590 = vsel %vm584, %v400, %v532
        %v592 = vsel %vm584, %v401, %v534
        %v594 = vsel %vm584, %v402, %v536
        %v596 = vsel %vm584, %v403, %v538
        %v598 = vsel %vm584, %v404, %v540
        %v600 = vsel %vm584, %v405, %v542
        %vm601 = vcmask 130048
        %v603 = vsel %vm601, %v586, %v569
        %v605 = vsel %vm601, %v588, %v571
        %v607 = vsel %vm601, %v590, %v573
        %v609 = vsel %vm601, %v592, %v575
        %v611 = vsel %vm601, %v594, %v577
        %v613 = vsel %vm601, %v596, %v579
        %v615 = vsel %vm601, %v598, %v581
        %v617 = vsel %vm601, %v600, %v583
        %v618 = vld [vmem:[%s2] sm:$0xf]
        %v619 = vld [vmem:[%s2 + $0x4] sm:$0xf]
        %v620 = vld [vmem:[%s2 + $0x8] sm:$0xf]
        %v623 = vunpack.c.l.b16 %v360
        %v624 = vunpack.c.l.b16 %v361
        %v625 = vpack.c.b16 %v624, %v623
        %v627 = vunpack.c.l.b16 %v362
        %v628 = vpack.c.b16 %v627, %v627
        %v630 = vshrl.u32 %v625, 16
        %v632 = vshll.u32 %v625, 16
        %v634 = vrot.slane %v632, 1
        %v635 = vor.u32 %v630, %v634
        %v637 = vshll.u32 %v628, 16
        %v639 = vrot.slane %v637, 1
        %v640 = vsel %vm430, %v635, %v639
        %641 = vrot.lane.b32.xlu0 %v640, 8
        %v642 = vpop.permute.xlu0 %641
        %v643 = vrot.slane %v625, 1
        %v644 = vrot.slane %v628, 1
        %v645 = vsel %vm543, %v643, %v644
        %646 = vrot.lane.b32.xlu0 %v645, 16
        %v647 = vpop.permute.xlu0 %646
        %v649 = vsel %vm584, %v625, %v642
        %v651 = vsel %vm601, %v649, %v647
        %s652 = scalar_lea.vmem %s2, 12
        %v653 = vld [vmem:[%s652] sm:$0xf]
        %v654 = vld [vmem:[%s652 + $0x4] sm:$0xf]
        %v655 = vld [vmem:[%s652 + $0x8] sm:$0xf]
        %v659 = vunpack.c.l.b16 %v653
        %v660 = vunpack.c.l.b16 %v654
        %v661 = vunpack.c.l.b16 %v655
        %v662 = vpack.c.b16 %v660, %v659
        %v663 = vpack.c.b16 %v661, %v661
        %vm665 = vcmask 195584
        %v666 = vsel %vm665, %v605, 0
        %v668 = vsel %vm665, %v607, 0
        %v670 = vsel %vm665, %v609, 0
        %v672 = vsel %vm665, %v611, 0
        %v674 = vsel %vm665, %v613, 0
        %v676 = vsel %vm665, %v615, 0
        %v678 = vsel %vm665, %v617, 0
        %v680 = vsel %vm665, %v651, 0
        %vm682 = vcmask 1043456
        %v684 = vsel %vm682, %v663, 0
        %686 = vmatprep.subr.bf16.mxu0 0
        %687 = vmatpush1.bf16.msra.mxu0 0
        %688 = vmatprep.subr.bf16.mxu0 0
        %689 = vmatpush1.bf16.msra.mxu0 0
        %690 = vmatprep.subr.bf16.mxu0 0
        %691 = vmatpush1.bf16.msra.mxu0 0
        %692 = vmatprep.subr.bf16.mxu0 0
        %693 = vmatpush1.bf16.msra.mxu0 0
        %694 = vmatprep.subr.bf16.mxu0 0
        %695 = vmatpush1.bf16.msra.mxu0 0
        %696 = vmatprep.subr.bf16.mxu0 0
        %697 = vmatpush1.bf16.msra.mxu0 0
        %698 = vmatprep.subr.bf16.mxu0 0
        %699 = vmatpush1.bf16.msra.mxu0 %v684
        %700 = vmatprep.subr.bf16.mxu0 0
        %701 = vmatpush1.bf16.msra.mxu0 %v662
        %702 = vmatprep.subr.bf16.mxu0 0
        %703 = vmatpush2.bf16.msra.mxu0 0
        %704 = vmatprep.subr.bf16.mxu0 0
        %705 = vmatpush2.bf16.msra.mxu0 0
        %706 = vmatprep.subr.bf16.mxu0 0
        %707 = vmatpush2.bf16.msra.mxu0 0
        %708 = vmatprep.subr.bf16.mxu0 0
        %709 = vmatpush2.bf16.msra.mxu0 0
        %710 = vmatprep.subr.bf16.mxu0 0
        %711 = vmatpush2.bf16.msra.mxu0 0
        %712 = vmatprep.subr.bf16.mxu0 0
        %713 = vmatpush2.bf16.msra.mxu0 0
        %714 = vmatprep.subr.bf16.mxu0 0
        %715 = vmatpush2.bf16.msra.mxu0 0
        %716 = vmatprep.subr.bf16.mxu0 0
        %717 = vmatpush2.bf16.msra.mxu0 0
        %718 = vmatprep.mubr.bf16.mxu0 0
        %719 = vmatmul.mubr.bf16.gmra.mxu0 %v666
        %v720 = vpop.f32.mrf.mxu0
        %v721 = vadd.f32 0.0, %v720
        %v722 = vpop.f32.mrf.mxu0
        %v723 = vpop.f32.mrf.mxu0
        %v724 = vadd.f32 0.0, %v723
        %v725 = vpop.f32.mrf.mxu0
        %726 = vmatprep.mubr.bf16.mxu0 0
        %727 = vmatmul.mubr.bf16.gmra.mxu0 %v668
        %v728 = vpop.f32.mrf.mxu0
        %v729 = vadd.f32 0.0, %v728
        %v730 = vpop.f32.mrf.mxu0
        %v731 = vpop.f32.mrf.mxu0
        %v732 = vadd.f32 0.0, %v731
        %v733 = vpop.f32.mrf.mxu0
        %734 = vmatprep.mubr.bf16.mxu0 0
        %735 = vmatmul.mubr.bf16.gmra.mxu0 %v670
        %v736 = vpop.f32.mrf.mxu0
        %v737 = vadd.f32 0.0, %v736
        %v738 = vpop.f32.mrf.mxu0
        %v739 = vpop.f32.mrf.mxu0
        %v740 = vadd.f32 0.0, %v739
        %v741 = vpop.f32.mrf.mxu0
        %742 = vmatprep.mubr.bf16.mxu0 0
        %743 = vmatmul.mubr.bf16.gmra.mxu0 %v672
        %v744 = vpop.f32.mrf.mxu0
        %v745 = vadd.f32 0.0, %v744
        %v746 = vpop.f32.mrf.mxu0
        %v747 = vpop.f32.mrf.mxu0
        %v748 = vadd.f32 0.0, %v747
        %v749 = vpop.f32.mrf.mxu0
        %750 = vmatprep.mubr.bf16.mxu0 0
        %751 = vmatmul.mubr.bf16.gmra.mxu0 %v674
        %v752 = vpop.f32.mrf.mxu0
        %v753 = vadd.f32 0.0, %v752
        %v754 = vpop.f32.mrf.mxu0
        %v755 = vpop.f32.mrf.mxu0
        %v756 = vadd.f32 0.0, %v755
        %v757 = vpop.f32.mrf.mxu0
        %758 = vmatprep.mubr.bf16.mxu0 0
        %759 = vmatmul.mubr.bf16.gmra.mxu0 %v676
        %v760 = vpop.f32.mrf.mxu0
        %v761 = vadd.f32 0.0, %v760
        %v762 = vpop.f32.mrf.mxu0
        %v763 = vpop.f32.mrf.mxu0
        %v764 = vadd.f32 0.0, %v763
        %v765 = vpop.f32.mrf.mxu0
        %766 = vmatprep.mubr.bf16.mxu0 0
        %767 = vmatmul.mubr.bf16.gmra.mxu0 %v678
        %v768 = vpop.f32.mrf.mxu0
        %v769 = vadd.f32 0.0, %v768
        %v770 = vpop.f32.mrf.mxu0
        %v771 = vpop.f32.mrf.mxu0
        %v772 = vadd.f32 0.0, %v771
        %v773 = vpop.f32.mrf.mxu0
        %774 = vmatprep.mubr.bf16.mxu0 0
        %775 = vmatmul.mubr.bf16.gmra.mxu0 %v680
        %v776 = vpop.f32.mrf.mxu0
        %v777 = vadd.f32 0.0, %v776
        %v778 = vpop.f32.mrf.mxu0
        %v779 = vpop.f32.mrf.mxu0
        %v780 = vadd.f32 0.0, %v779
        %v781 = vpop.f32.mrf.mxu0
        %782 = vdwg.mxu0
        %v786 = vunpack.c.l.b16 %v618
        %v787 = vunpack.c.l.b16 %v619
        %v788 = vunpack.c.l.b16 %v620
        %v789 = vpack.c.b16 %v787, %v786
        %v790 = vpack.c.b16 %v788, %v788
        %v792 = vsel %vm665, %v603, 0
        %v795 = vsel %vm682, %v790, 0
        %797 = vmatprep.subr.bf16.mxu0 0
        %798 = vmatpush1.bf16.msra.mxu0 0
        %799 = vmatprep.subr.bf16.mxu0 0
        %800 = vmatpush1.bf16.msra.mxu0 0
        %801 = vmatprep.subr.bf16.mxu0 0
        %802 = vmatpush1.bf16.msra.mxu0 0
        %803 = vmatprep.subr.bf16.mxu0 0
        %804 = vmatpush1.bf16.msra.mxu0 0
        %805 = vmatprep.subr.bf16.mxu0 0
        %806 = vmatpush1.bf16.msra.mxu0 0
        %807 = vmatprep.subr.bf16.mxu0 0
        %808 = vmatpush1.bf16.msra.mxu0 0
        %809 = vmatprep.subr.bf16.mxu0 0
        %810 = vmatpush1.bf16.msra.mxu0 %v795
        %811 = vmatprep.subr.bf16.mxu0 0
        %812 = vmatpush1.bf16.msra.mxu0 %v789
        %813 = vmatprep.subr.bf16.mxu0 0
        %814 = vmatpush2.bf16.msra.mxu0 0
        %815 = vmatprep.subr.bf16.mxu0 0
        %816 = vmatpush2.bf16.msra.mxu0 0
        %817 = vmatprep.subr.bf16.mxu0 0
        %818 = vmatpush2.bf16.msra.mxu0 0
        %819 = vmatprep.subr.bf16.mxu0 0
        %820 = vmatpush2.bf16.msra.mxu0 0
        %821 = vmatprep.subr.bf16.mxu0 0
        %822 = vmatpush2.bf16.msra.mxu0 0
        %823 = vmatprep.subr.bf16.mxu0 0
        %824 = vmatpush2.bf16.msra.mxu0 0
        %825 = vmatprep.subr.bf16.mxu0 0
        %826 = vmatpush2.bf16.msra.mxu0 0
        %827 = vmatprep.subr.bf16.mxu0 0
        %828 = vmatpush2.bf16.msra.mxu0 0
        %829 = vmatprep.mubr.bf16.mxu0 0
        %830 = vmatmul.mubr.bf16.gmra.mxu0 %v792
        %v831 = vpop.f32.mrf.mxu0
        %v832 = vadd.f32 %v721, %v831
        %v833 = vpop.f32.mrf.mxu0
        %v834 = vpop.f32.mrf.mxu0
        %v835 = vadd.f32 %v724, %v834
        %v836 = vpop.f32.mrf.mxu0
        %837 = vmatprep.mubr.bf16.mxu0 0
        %838 = vmatmul.mubr.bf16.gmra.mxu0 %v666
        %v839 = vpop.f32.mrf.mxu0
        %v840 = vadd.f32 %v729, %v839
        %v841 = vpop.f32.mrf.mxu0
        %v842 = vpop.f32.mrf.mxu0
        %v843 = vadd.f32 %v732, %v842
        %v844 = vpop.f32.mrf.mxu0
        %845 = vmatprep.mubr.bf16.mxu0 0
        %846 = vmatmul.mubr.bf16.gmra.mxu0 %v668
        %v847 = vpop.f32.mrf.mxu0
        %v848 = vadd.f32 %v737, %v847
        %v849 = vpop.f32.mrf.mxu0
        %v850 = vpop.f32.mrf.mxu0
        %v851 = vadd.f32 %v740, %v850
        %v852 = vpop.f32.mrf.mxu0
        %853 = vmatprep.mubr.bf16.mxu0 0
        %854 = vmatmul.mubr.bf16.gmra.mxu0 %v670
        %v855 = vpop.f32.mrf.mxu0
        %v856 = vadd.f32 %v745, %v855
        %v857 = vpop.f32.mrf.mxu0
        %v858 = vpop.f32.mrf.mxu0
        %v859 = vadd.f32 %v748, %v858
        %v860 = vpop.f32.mrf.mxu0
        %861 = vmatprep.mubr.bf16.mxu0 0
        %862 = vmatmul.mubr.bf16.gmra.mxu0 %v672
        %v863 = vpop.f32.mrf.mxu0
        %v864 = vadd.f32 %v753, %v863
        %v865 = vpop.f32.mrf.mxu0
        %v866 = vpop.f32.mrf.mxu0
        %v867 = vadd.f32 %v756, %v866
        %v868 = vpop.f32.mrf.mxu0
        %869 = vmatprep.mubr.bf16.mxu0 0
        %870 = vmatmul.mubr.bf16.gmra.mxu0 %v674
        %v871 = vpop.f32.mrf.mxu0
        %v872 = vadd.f32 %v761, %v871
        %v873 = vpop.f32.mrf.mxu0
        %v874 = vpop.f32.mrf.mxu0
        %v875 = vadd.f32 %v764, %v874
        %v876 = vpop.f32.mrf.mxu0
        %877 = vmatprep.mubr.bf16.mxu0 0
        %878 = vmatmul.mubr.bf16.gmra.mxu0 %v676
        %v879 = vpop.f32.mrf.mxu0
        %v880 = vadd.f32 %v769, %v879
        %v881 = vpop.f32.mrf.mxu0
        %v882 = vpop.f32.mrf.mxu0
        %v883 = vadd.f32 %v772, %v882
        %v884 = vpop.f32.mrf.mxu0
        %885 = vmatprep.mubr.bf16.mxu0 0
        %886 = vmatmul.mubr.bf16.gmra.mxu0 %v678
        %v887 = vpop.f32.mrf.mxu0
        %v888 = vadd.f32 %v777, %v887
        %v889 = vpop.f32.mrf.mxu0
        %v890 = vpop.f32.mrf.mxu0
        %v891 = vadd.f32 %v780, %v890
        %v892 = vpop.f32.mrf.mxu0
        %893 = vdwg.mxu0
        %v896 = vunpack.c.l.b16 %v363
        %v897 = vunpack.c.l.b16 %v364
        %v898 = vpack.c.b16 %v897, %v896
        %v900 = vunpack.c.l.b16 %v365
        %v901 = vpack.c.b16 %v900, %v900
        %v903 = vshrl.u32 %v898, 16
        %v905 = vshll.u32 %v898, 16
        %v907 = vrot.slane %v905, 1
        %v908 = vor.u32 %v903, %v907
        %v910 = vshll.u32 %v901, 16
        %v912 = vrot.slane %v910, 1
        %v913 = vsel %vm430, %v908, %v912
        %914 = vrot.lane.b32.xlu0 %v913, 8
        %v915 = vpop.permute.xlu0 %914
        %v916 = vrot.slane %v898, 1
        %v917 = vrot.slane %v901, 1
        %v918 = vsel %vm543, %v916, %v917
        %919 = vrot.lane.b32.xlu0 %v918, 16
        %v920 = vpop.permute.xlu0 %919
        %v922 = vsel %vm584, %v898, %v915
        %v924 = vsel %vm601, %v922, %v920
        %s925 = scalar_lea.vmem %s2, 24
        %v926 = vld [vmem:[%s925] sm:$0xf]
        %v927 = vld [vmem:[%s925 + $0x4] sm:$0xf]
        %v928 = vld [vmem:[%s925 + $0x8] sm:$0xf]
        %v932 = vunpack.c.l.b16 %v926
        %v933 = vunpack.c.l.b16 %v927
        %v934 = vunpack.c.l.b16 %v928
        %v935 = vpack.c.b16 %v933, %v932
        %v936 = vpack.c.b16 %v934, %v934
        %v938 = vsel %vm665, %v924, 0
        %v941 = vsel %vm682, %v936, 0
        %943 = vmatprep.subr.bf16.mxu0 0
        %944 = vmatpush1.bf16.msra.mxu0 0
        %945 = vmatprep.subr.bf16.mxu0 0
        %946 = vmatpush1.bf16.msra.mxu0 0
        %947 = vmatprep.subr.bf16.mxu0 0
        %948 = vmatpush1.bf16.msra.mxu0 0
        %949 = vmatprep.subr.bf16.mxu0 0
        %950 = vmatpush1.bf16.msra.mxu0 0
        %951 = vmatprep.subr.bf16.mxu0 0
        %952 = vmatpush1.bf16.msra.mxu0 0
        %953 = vmatprep.subr.bf16.mxu0 0
        %954 = vmatpush1.bf16.msra.mxu0 0
        %955 = vmatprep.subr.bf16.mxu0 0
        %956 = vmatpush1.bf16.msra.mxu0 %v941
        %957 = vmatprep.subr.bf16.mxu0 0
        %958 = vmatpush1.bf16.msra.mxu0 %v935
        %959 = vmatprep.subr.bf16.mxu0 0
        %960 = vmatpush2.bf16.msra.mxu0 0
        %961 = vmatprep.subr.bf16.mxu0 0
        %962 = vmatpush2.bf16.msra.mxu0 0
        %963 = vmatprep.subr.bf16.mxu0 0
        %964 = vmatpush2.bf16.msra.mxu0 0
        %965 = vmatprep.subr.bf16.mxu0 0
        %966 = vmatpush2.bf16.msra.mxu0 0
        %967 = vmatprep.subr.bf16.mxu0 0
        %968 = vmatpush2.bf16.msra.mxu0 0
        %969 = vmatprep.subr.bf16.mxu0 0
        %970 = vmatpush2.bf16.msra.mxu0 0
        %971 = vmatprep.subr.bf16.mxu0 0
        %972 = vmatpush2.bf16.msra.mxu0 0
        %973 = vmatprep.subr.bf16.mxu0 0
        %974 = vmatpush2.bf16.msra.mxu0 0
        %975 = vmatprep.mubr.bf16.mxu0 0
        %976 = vmatmul.mubr.bf16.gmra.mxu0 %v668
        %v977 = vpop.f32.mrf.mxu0
        %v978 = vadd.f32 0.0, %v977
        %v979 = vpop.f32.mrf.mxu0
        %v980 = vpop.f32.mrf.mxu0
        %v981 = vadd.f32 0.0, %v980
        %v982 = vpop.f32.mrf.mxu0
        %983 = vmatprep.mubr.bf16.mxu0 0
        %984 = vmatmul.mubr.bf16.gmra.mxu0 %v670
        %v985 = vpop.f32.mrf.mxu0
        %v986 = vadd.f32 0.0, %v985
        %v987 = vpop.f32.mrf.mxu0
        %v988 = vpop.f32.mrf.mxu0
        %v989 = vadd.f32 0.0, %v988
        %v990 = vpop.f32.mrf.mxu0
        %991 = vmatprep.mubr.bf16.mxu0 0
        %992 = vmatmul.mubr.bf16.gmra.mxu0 %v672
        %v993 = vpop.f32.mrf.mxu0
        %v994 = vadd.f32 0.0, %v993
        %v995 = vpop.f32.mrf.mxu0
        %v996 = vpop.f32.mrf.mxu0
        %v997 = vadd.f32 0.0, %v996
        %v998 = vpop.f32.mrf.mxu0
        %999 = vmatprep.mubr.bf16.mxu0 0
        %1000 = vmatmul.mubr.bf16.gmra.mxu0 %v674
        %v1001 = vpop.f32.mrf.mxu0
        %v1002 = vadd.f32 0.0, %v1001
        %v1003 = vpop.f32.mrf.mxu0
        %v1004 = vpop.f32.mrf.mxu0
        %v1005 = vadd.f32 0.0, %v1004
        %v1006 = vpop.f32.mrf.mxu0
        %1007 = vmatprep.mubr.bf16.mxu0 0
        %1008 = vmatmul.mubr.bf16.gmra.mxu0 %v676
        %v1009 = vpop.f32.mrf.mxu0
        %v1010 = vadd.f32 0.0, %v1009
        %v1011 = vpop.f32.mrf.mxu0
        %v1012 = vpop.f32.mrf.mxu0
        %v1013 = vadd.f32 0.0, %v1012
        %v1014 = vpop.f32.mrf.mxu0
        %1015 = vmatprep.mubr.bf16.mxu0 0
        %1016 = vmatmul.mubr.bf16.gmra.mxu0 %v678
        %v1017 = vpop.f32.mrf.mxu0
        %v1018 = vadd.f32 0.0, %v1017
        %v1019 = vpop.f32.mrf.mxu0
        %v1020 = vpop.f32.mrf.mxu0
        %v1021 = vadd.f32 0.0, %v1020
        %v1022 = vpop.f32.mrf.mxu0
        %1023 = vmatprep.mubr.bf16.mxu0 0
        %1024 = vmatmul.mubr.bf16.gmra.mxu0 %v680
        %v1025 = vpop.f32.mrf.mxu0
        %v1026 = vadd.f32 0.0, %v1025
        %v1027 = vpop.f32.mrf.mxu0
        %v1028 = vpop.f32.mrf.mxu0
        %v1029 = vadd.f32 0.0, %v1028
        %v1030 = vpop.f32.mrf.mxu0
        %1031 = vmatprep.mubr.bf16.mxu0 0
        %1032 = vmatmul.mubr.bf16.gmra.mxu0 %v938
        %v1033 = vpop.f32.mrf.mxu0
        %v1034 = vadd.f32 0.0, %v1033
        %v1035 = vpop.f32.mrf.mxu0
        %v1036 = vpop.f32.mrf.mxu0
        %v1037 = vadd.f32 0.0, %v1036
        %v1038 = vpop.f32.mrf.mxu0
        %1039 = vdwg.mxu0
        %v1040 = vadd.f32 %v832, %v978
        %v1041 = vadd.f32 %v835, %v981
        %v1042 = vadd.f32 %v840, %v986
        %v1043 = vadd.f32 %v843, %v989
        %v1044 = vadd.f32 %v848, %v994
        %v1045 = vadd.f32 %v851, %v997
        %v1046 = vadd.f32 %v856, %v1002
        %v1047 = vadd.f32 %v859, %v1005
        %v1048 = vadd.f32 %v864, %v1010
        %v1049 = vadd.f32 %v867, %v1013
        %v1050 = vadd.f32 %v872, %v1018
        %v1051 = vadd.f32 %v875, %v1021
        %v1052 = vadd.f32 %v880, %v1026
        %v1053 = vadd.f32 %v883, %v1029
        %v1054 = vadd.f32 %v888, %v1034
        %v1055 = vadd.f32 %v891, %v1037
        %v1056 = vld [vmem:[%s3] sm:$0x1]
        %v1058 = vlaneseq
        %v1059 = vshrl.u32 %v1058, 7
        %v1060 = vsub.s32 0, %v1059
        %v1061 = vrot.slane %v1056, %v1060
        %v1063 = vadd.f32 %v1040, %v1061
        %v1064 = vadd.f32 %v1041, %v1061
        %v1065 = vadd.f32 %v1042, %v1061
        %v1066 = vadd.f32 %v1043, %v1061
        %v1067 = vadd.f32 %v1044, %v1061
        %v1068 = vadd.f32 %v1045, %v1061
        %v1069 = vadd.f32 %v1046, %v1061
        %v1070 = vadd.f32 %v1047, %v1061
        %v1071 = vadd.f32 %v1048, %v1061
        %v1072 = vadd.f32 %v1049, %v1061
        %v1073 = vadd.f32 %v1050, %v1061
        %v1074 = vadd.f32 %v1051, %v1061
        %v1075 = vadd.f32 %v1052, %v1061
        %v1076 = vadd.f32 %v1053, %v1061
        %v1077 = vadd.f32 %v1054, %v1061
        %v1078 = vadd.f32 %v1055, %v1061
        %vm1079 = vcmp.ge.f32.partialorder %v1063, 0.0
        %vm1080 = vcmp.ge.f32.partialorder %v1064, 0.0
        %vm1081 = vcmp.ge.f32.partialorder %v1065, 0.0
        %vm1082 = vcmp.ge.f32.partialorder %v1066, 0.0
        %vm1083 = vcmp.ge.f32.partialorder %v1067, 0.0
        %vm1084 = vcmp.ge.f32.partialorder %v1068, 0.0
        %vm1085 = vcmp.ge.f32.partialorder %v1069, 0.0
        %vm1086 = vcmp.ge.f32.partialorder %v1070, 0.0
        %vm1087 = vcmp.ge.f32.partialorder %v1071, 0.0
        %vm1088 = vcmp.ge.f32.partialorder %v1072, 0.0
        %vm1089 = vcmp.ge.f32.partialorder %v1073, 0.0
        %vm1090 = vcmp.ge.f32.partialorder %v1074, 0.0
        %vm1091 = vcmp.ge.f32.partialorder %v1075, 0.0
        %vm1092 = vcmp.ge.f32.partialorder %v1076, 0.0
        %vm1093 = vcmp.ge.f32.partialorder %v1077, 0.0
        %vm1094 = vcmp.ge.f32.partialorder %v1078, 0.0
        %v1095 = vld [vmem:[%s4] sm:$0x1]
        %v1097 = vlaneseq
        %v1098 = vshrl.u32 %v1097, 7
        %v1099 = vsub.s32 0, %v1098
        %v1100 = vrot.slane %v1095, %v1099
        %v1102 = vmul.f32 %v1100, %v1063
        %v1103 = vmul.f32 %v1100, %v1064
        %v1104 = vmul.f32 %v1100, %v1065
        %v1105 = vmul.f32 %v1100, %v1066
        %v1106 = vmul.f32 %v1100, %v1067
        %v1107 = vmul.f32 %v1100, %v1068
        %v1108 = vmul.f32 %v1100, %v1069
        %v1109 = vmul.f32 %v1100, %v1070
        %v1110 = vmul.f32 %v1100, %v1071
        %v1111 = vmul.f32 %v1100, %v1072
        %v1112 = vmul.f32 %v1100, %v1073
        %v1113 = vmul.f32 %v1100, %v1074
        %v1114 = vmul.f32 %v1100, %v1075
        %v1115 = vmul.f32 %v1100, %v1076
        %v1116 = vmul.f32 %v1100, %v1077
        %v1117 = vmul.f32 %v1100, %v1078
        %v1118 = vsel %vm1079, %v1063, %v1102
        %v1119 = vsel %vm1080, %v1064, %v1103
        %v1120 = vsel %vm1081, %v1065, %v1104
        %v1121 = vsel %vm1082, %v1066, %v1105
        %v1122 = vsel %vm1083, %v1067, %v1106
        %v1123 = vsel %vm1084, %v1068, %v1107
        %v1124 = vsel %vm1085, %v1069, %v1108
        %v1125 = vsel %vm1086, %v1070, %v1109
        %v1126 = vsel %vm1087, %v1071, %v1110
        %v1127 = vsel %vm1088, %v1072, %v1111
        %v1128 = vsel %vm1089, %v1073, %v1112
        %v1129 = vsel %vm1090, %v1074, %v1113
        %v1130 = vsel %vm1091, %v1075, %v1114
        %v1131 = vsel %vm1092, %v1076, %v1115
        %v1132 = vsel %vm1093, %v1077, %v1116
        %v1133 = vsel %vm1094, %v1078, %v1117
        %v1134 = vpack.c.bf16 %v1119, %v1118
        %v1135 = vpack.c.bf16 %v1121, %v1120
        %v1136 = vpack.c.bf16 %v1123, %v1122
        %v1137 = vpack.c.bf16 %v1125, %v1124
        %v1138 = vpack.c.bf16 %v1127, %v1126
        %v1139 = vpack.c.bf16 %v1129, %v1128
        %v1140 = vpack.c.bf16 %v1131, %v1130
        %v1141 = vpack.c.bf16 %v1133, %v1132
        %v1150 = vunpack.c.l.b16 %v1134
        %v1151 = vunpack.c.h.b16 %v1134
        %v1152 = vunpack.c.l.b16 %v1135
        %v1153 = vunpack.c.h.b16 %v1135
        %v1154 = vunpack.c.l.b16 %v1136
        %v1155 = vunpack.c.h.b16 %v1136
        %v1156 = vunpack.c.l.b16 %v1137
        %v1157 = vunpack.c.h.b16 %v1137
        %v1158 = vunpack.c.l.b16 %v1138
        %v1159 = vunpack.c.h.b16 %v1138
        %v1160 = vunpack.c.l.b16 %v1139
        %v1161 = vunpack.c.h.b16 %v1139
        %v1162 = vunpack.c.l.b16 %v1140
        %v1163 = vunpack.c.h.b16 %v1140
        %v1164 = vunpack.c.l.b16 %v1141
        %v1165 = vunpack.c.h.b16 %v1141
        %v1166 = vpack.c.b16 %v1150, %v1150
        %v1167 = vpack.c.b16 %v1151, %v1151
        %v1168 = vpack.c.b16 %v1152, %v1152
        %v1169 = vpack.c.b16 %v1153, %v1153
        %v1170 = vpack.c.b16 %v1154, %v1154
        %v1171 = vpack.c.b16 %v1155, %v1155
        %v1172 = vpack.c.b16 %v1156, %v1156
        %v1173 = vpack.c.b16 %v1157, %v1157
        %v1174 = vpack.c.b16 %v1158, %v1158
        %v1175 = vpack.c.b16 %v1159, %v1159
        %v1176 = vpack.c.b16 %v1160, %v1160
        %v1177 = vpack.c.b16 %v1161, %v1161
        %v1178 = vpack.c.b16 %v1162, %v1162
        %v1179 = vpack.c.b16 %v1163, %v1163
        %v1180 = vpack.c.b16 %v1164, %v1164
        %v1181 = vpack.c.b16 %v1165, %v1165
        %vm1198 = vcmask 125952
        %1199 = vst.msk [vmem:[%s297] sm:$0xf] %vm1198, %v1166
        %1200 = vst.msk [vmem:[%s297 + $0x4] sm:$0xf] %vm1198, %v1167
        %1201 = vst.msk [vmem:[%s297 + $0x8] sm:$0xf] %vm1198, %v1168
        %1202 = vst.msk [vmem:[%s297 + $0xc] sm:$0xf] %vm1198, %v1169
        %1203 = vst.msk [vmem:[%s297 + $0x10] sm:$0xf] %vm1198, %v1170
        %1204 = vst.msk [vmem:[%s297 + $0x14] sm:$0xf] %vm1198, %v1171
        %1205 = vst.msk [vmem:[%s297 + $0x18] sm:$0xf] %vm1198, %v1172
        %1206 = vst.msk [vmem:[%s297 + $0x1c] sm:$0xf] %vm1198, %v1173
        %1207 = vst.msk [vmem:[%s297 + $0x20] sm:$0xf] %vm1198, %v1174
        %1208 = vst.msk [vmem:[%s297 + $0x24] sm:$0xf] %vm1198, %v1175
        %1209 = vst.msk [vmem:[%s297 + $0x28] sm:$0xf] %vm1198, %v1176
        %1210 = vst.msk [vmem:[%s297 + $0x2c] sm:$0xf] %vm1198, %v1177
        %1211 = vst.msk [vmem:[%s297 + $0x30] sm:$0xf] %vm1198, %v1178
        %1212 = vst.msk [vmem:[%s297 + $0x34] sm:$0xf] %vm1198, %v1179
        %1213 = vst.msk [vmem:[%s297 + $0x38] sm:$0xf] %vm1198, %v1180
        %1214 = vst.msk [vmem:[%s297 + $0x3c] sm:$0xf] %vm1198, %v1181
        %s1215 = sand.u32 %s164, 1
        %s1216 = scalar_lea.sflag [#allocation3], %s1215
        %s1217 = sand.u32 %s164, 1
        %s1218 = smul.addr %s1217, 64
        %s1219 = scalar_lea.vmem [#allocation2], %s1218
        // Predicated region
        $region41: #{tpu_custom_call.1} parent=39 // pred_check
          %p1220 = pneg %p174
        $region42: #{tpu_custom_call.1} parent=39 // pred_check_branch
          %1222 = sbr.rel (%p1220) target = $region44
        $region43: #{tpu_custom_call.1} parent=39 // pred_region
          %s1223 = smul.u32 8, %s24
          %s1225 = ssub.s32 1024, 1024
          %1226 = vsyncadd %s1216, %s1225
          %s1227 = smul.addr %s1223, 2
          %s1228 = smul.addr %s23, 32
          %s1229 = sadd.s32 %s1227, %s1228
          %s1230 = smul.addr %s1229, 64
          %s1231 = scalar_lea.hbm %s5, %s1230
          %s1232 = sshll.u32 %s1219, 4
          %s1233 = int_to_ptr.vmem [resolvable:$true] %s1232
          %1238 = dma.vmem_to_hbm [thread:$0]  %s1233, 1024, %s1231, %s1216, 64, 64, 4
        $region44: #{tpu_custom_call.1} parent=39 // pred_fallthru
          _
      $region40: #{tpu_custom_call.1} parent=5 // pred_fallthru
        _
      %p1239 = scmp.le.s32.totalorder 2, %s14
      // Predicated region
      $region45: #{tpu_custom_call.1} parent=5 // pred_check
        %p1240 = pneg %p1239
      $region46: #{tpu_custom_call.1} parent=5 // pred_check_branch
        %1242 = sbr.rel (%p1240) target = $region48
      $region47: #{tpu_custom_call.1} parent=5 // pred_region
        %s1243 = ssub.s32 %s14, 2
        // Predicated region
        $region49: #{tpu_custom_call.1} parent=47 // pred_check
          %p1244 = pneg %p180
        $region50: #{tpu_custom_call.1} parent=47 // pred_check_branch
          %1246 = sbr.rel (%p1244) target = $region52
        $region51: #{tpu_custom_call.1} parent=47 // pred_region
          %s1247 = sand.u32 %s165, 1
          %s1248 = scalar_lea.sflag [#allocation3], %s1247
          %s1249 = sand.u32 %s165, 1
          %s1250 = smul.addr %s1249, 64
          %s1251 = scalar_lea.vmem [#allocation2], %s1250
          %1252 = dma.done %s1248, 1024
        $region52: #{tpu_custom_call.1} parent=47 // pred_fallthru
          _
      $region48: #{tpu_custom_call.1} parent=5 // pred_fallthru
        _
    $region6: #{tpu_custom_call.1} parent=1 // loop_footer
      %s18 = sadd.s32 1, %s14
    $region7: #{tpu_custom_call.1} parent=1 // loop_footer_branch
      %13 = sbr.rel target = $region3
    $region8: #{tpu_custom_call.1} parent=1 // loop_exit
      _
    %1253 = vsyncpa [#allocation3], 1
    %s1254 = scalar_lea.sflag [#allocation3], 1
    %1255 = vsyncpa %s1254, 1

</llo_original>
